<compile_context>
chip_gen: v7x
topology: tpu7x:2x2x1
jax: 0.10.0
libtpu: 0.0.40
codegen_flags: <defaults>
</compile_context>

<pallas_src>
import functools

import jax
import jax.numpy as jnp
from jax.experimental import pallas as pl
from jax.experimental.pallas import tpu as pltpu

_NEG_BIG = -1e30                      # padding for lanes beyond the vocab width
_VMEM_LIMIT_BYTES = 32 * 1024 * 1024  # well under v7x's 64 MiB physical VMEM
_MAX_ROWS_PER_STEP = 256              # R: rows gathered per grid step
# Table-in-VMEM threshold: the (V, 1, Vp) f32 view may be sublane-padded up to
# 8x in VMEM and Pallas may hold two buffers of it -> require 2*8*V*Vp*4 bytes
# to fit comfortably on every generation (v7x included).
_TABLE_VMEM_BUDGET = 12 * 1024 * 1024


def _round_up(x, m):
    return ((x + m - 1) // m) * m


# ---------------------------------------------------------------------------
# Fast path: whole (padded) table resident in VMEM, R rows per grid step.
# ---------------------------------------------------------------------------

def _ce_partial_sum(rows, tgt, step, rows_per_step, n_valid):
    """Cross-entropy partial sum for one (R, Vp) block of logits.

    rows: (R, Vp) f32 logits (padded lanes hold -1e30 -> exp underflows to 0)
    tgt:  (R, 1)  int32 target ids
    Returns a (1, 1, 1) f32 partial sum over the valid rows of this block.
    """
    m = jnp.max(rows, axis=-1, keepdims=True)                       # (R, 1)
    lse = jnp.log(jnp.sum(jnp.exp(rows - m), axis=-1, keepdims=True)) + m
    lane = jax.lax.broadcasted_iota(jnp.int32, rows.shape, 1)       # (R, Vp)
    tgt_logit = jnp.sum(jnp.where(lane == tgt, rows, 0.0),
                        axis=-1, keepdims=True)                     # (R, 1)
    per_row = lse - tgt_logit
    row_idx = step * rows_per_step + jax.lax.broadcasted_iota(
        jnp.int32, per_row.shape, 0)
    per_row = jnp.where(row_idx < n_valid, per_row, 0.0)            # mask pad rows
    return jnp.sum(per_row).reshape(1, 1, 1)


def _gather_rows_into(ids_smem, table_ref, dst_ref, base, rows_per_step):
    """Copy R embedding rows table[ids[base + j]] into dst_ref (VMEM -> VMEM).

    Static Python unroll (R is compile-time) so store offsets are static; only
    the table's leading-axis index is dynamic (an SMEM scalar read), the same
    pattern as indexing a double-buffered scratch with a dynamic slot.
    """
    for j in range(rows_per_step):
        dst_ref[pl.ds(j, 1), :] = table_ref[ids_smem[base + j]]


def _table_logits_kernel(ids_smem, table_ref, logits_ref, *, rows_per_step):
    step = pl.program_id(0)
    _gather_rows_into(ids_smem, table_ref, logits_ref,
                      step * rows_per_step, rows_per_step)


def _table_logits_loss_kernel(ids_smem, tgt_ref, table_ref, logits_ref,
                              loss_ref, *, rows_per_step, n_valid):
    step = pl.program_id(0)
    _gather_rows_into(ids_smem, table_ref, logits_ref,
                      step * rows_per_step, rows_per_step)
    loss_ref[...] = _ce_partial_sum(logits_ref[...], tgt_ref[...],
                                    step, rows_per_step, n_valid)


def _table_loss_only_kernel(ids_smem, tgt_ref, table_ref, loss_ref, rows_vmem,
                            *, rows_per_step, n_valid):
    step = pl.program_id(0)
    _gather_rows_into(ids_smem, table_ref, rows_vmem,
                      step * rows_per_step, rows_per_step)
    loss_ref[...] = _ce_partial_sum(rows_vmem[...], tgt_ref[...],
                                    step, rows_per_step, n_valid)


# ---------------------------------------------------------------------------
# Large-vocab fallback: scalar-prefetch-driven per-row gather (table in HBM).
# ---------------------------------------------------------------------------

def _bigram_gather_kernel(ids_ref, row_ref, logits_ref):
    del ids_ref  # only used by the index_map
    logits_ref[...] = row_ref[...]


def _bigram_gather_loss_kernel(ids_ref, tgt_ref, row_ref, logits_ref, loss_ref):
    del ids_ref
    i = pl.program_id(0)
    row = row_ref[...]                                              # (1, 1, Vp)
    logits_ref[...] = row
    m = jnp.max(row, axis=-1, keepdims=True)
    lse = jnp.log(jnp.sum(jnp.exp(row - m), axis=-1, keepdims=True)) + m
    t = tgt_ref[i]
    lane = jax.lax.broadcasted_iota(jnp.int32, row.shape, 2)
    tgt_logit = jnp.sum(jnp.where(lane == t, row, 0.0), axis=-1, keepdims=True)
    loss_ref[...] = lse - tgt_logit


class BigramModelPallas:
    def __init__(self, vocab_size, key):
        self.vocab_size = vocab_size
        # nn.Embedding default init: N(0, 1)
        self.token_lookup_table = jax.random.normal(
            key, (vocab_size, vocab_size), dtype=jnp.float32)
        self._force_row_gather = False   # test hook for the fallback path
        self._refresh_table_cache()

    def _refresh_table_cache(self):
        """(Re)build cached padded table views. Call after table updates."""
        V = self.vocab_size
        Vp = _round_up(V, 128)
        tbl = self.token_lookup_table
        if Vp != V:
            tbl = jnp.pad(tbl, ((0, 0), (0, Vp - V)), constant_values=_NEG_BIG)
        self._vp = Vp
        self._table_rows3d = tbl.reshape(V, 1, Vp)   # gather-friendly view
        self._use_vmem_table = (2 * 8 * V * Vp * 4) <= _TABLE_VMEM_BUDGET

    # -- public API ---------------------------------------------------------

    def forward(self, x, targets=None):
        B, T = x.shape
        N = B * T
        V = self.vocab_size
        # Clamp ids/targets as a cheap safety net against out-of-range tokens.
        ids = jnp.clip(x.reshape(N).astype(jnp.int32), 0, V - 1)
        tgt = None
        if targets is not None:
            tgt = jnp.clip(targets.reshape(N).astype(jnp.int32), 0, V - 1)
        if self._use_vmem_table and not self._force_row_gather:
            return self._forward_vmem_table(ids, tgt, B, T)
        return self._forward_row_gather(ids, tgt, B, T)

    def loss_only(self, x, targets):
        """Training helper: mean cross-entropy without the logits writeback."""
        B, T = x.shape
        N = B * T
        V = self.vocab_size
        ids = jnp.clip(x.reshape(N).astype(jnp.int32), 0, V - 1)
        tgt = jnp.clip(targets.reshape(N).astype(jnp.int32), 0, V - 1)
        if not (self._use_vmem_table and not self._force_row_gather):
            return self.forward(x, targets)[1]
        Vp = self._vp
        R, Npad, steps, ids, tgt = self._pad_rows(N, ids, tgt)
        loss_parts = pl.pallas_call(
            functools.partial(_table_loss_only_kernel,
                              rows_per_step=R, n_valid=N),
            out_shape=jax.ShapeDtypeStruct((steps, 1, 1), jnp.float32),
            grid_spec=pltpu.PrefetchScalarGridSpec(
                num_scalar_prefetch=1,
                grid=(steps,),
                in_specs=[
                    pl.BlockSpec((R, 1), lambda s, ids_ref: (s, 0)),
                    pl.BlockSpec((V, 1, Vp), lambda s, ids_ref: (0, 0, 0)),
                ],
                out_specs=pl.BlockSpec((1, 1, 1), lambda s, ids_ref: (s, 0, 0)),
                scratch_shapes=[pltpu.VMEM((R, Vp), jnp.float32)],
            ),
            compiler_params=pltpu.CompilerParams(
                dimension_semantics=("parallel",),
                vmem_limit_bytes=_VMEM_LIMIT_BYTES),
        )(ids, tgt.reshape(Npad, 1), self._table_rows3d)
        return jnp.sum(loss_parts) * (1.0 / N)

    # -- helpers ------------------------------------------------------------

    def _pad_rows(self, N, ids, tgt):
        R = _round_up(min(N, _MAX_ROWS_PER_STEP), 8)
        Npad = _round_up(N, R)
        steps = Npad // R
        if Npad != N:
            ids = jnp.pad(ids, (0, Npad - N))
            if tgt is not None:
                tgt = jnp.pad(tgt, (0, Npad - N))
        return R, Npad, steps, ids, tgt

    def _forward_vmem_table(self, ids, tgt, B, T):
        N = B * T
        V, Vp = self.vocab_size, self._vp
        R, Npad, steps, ids, tgt = self._pad_rows(N, ids, tgt)
        cparams = pltpu.CompilerParams(
            dimension_semantics=("parallel",),
            vmem_limit_bytes=_VMEM_LIMIT_BYTES)

        if tgt is None:
            logits_pad = pl.pallas_call(
                functools.partial(_table_logits_kernel, rows_per_step=R),
                out_shape=jax.ShapeDtypeStruct((Npad, Vp), jnp.float32),
                grid_spec=pltpu.PrefetchScalarGridSpec(
                    num_scalar_prefetch=1,
                    grid=(steps,),
                    in_specs=[
                        pl.BlockSpec((V, 1, Vp), lambda s, ids_ref: (0, 0, 0)),
                    ],
                    out_specs=pl.BlockSpec((R, Vp), lambda s, ids_ref: (s, 0)),
                ),
                compiler_params=cparams,
            )(ids, self._table_rows3d)
            logits2d = (logits_pad if (Npad == N and Vp == V)
                        else logits_pad[:N, :V])
            return logits2d.reshape(B, T, V), None

        logits_pad, loss_parts = pl.pallas_call(
            functools.partial(_table_logits_loss_kernel,
                              rows_per_step=R, n_valid=N),
            out_shape=(
                jax.ShapeDtypeStruct((Npad, Vp), jnp.float32),
                jax.ShapeDtypeStruct((steps, 1, 1), jnp.float32),
            ),
            grid_spec=pltpu.PrefetchScalarGridSpec(
                num_scalar_prefetch=1,
                grid=(steps,),
                in_specs=[
                    pl.BlockSpec((R, 1), lambda s, ids_ref: (s, 0)),
                    pl.BlockSpec((V, 1, Vp), lambda s, ids_ref: (0, 0, 0)),
                ],
                out_specs=(
                    pl.BlockSpec((R, Vp), lambda s, ids_ref: (s, 0)),
                    pl.BlockSpec((1, 1, 1), lambda s, ids_ref: (s, 0, 0)),
                ),
            ),
            compiler_params=cparams,
        )(ids, tgt.reshape(Npad, 1), self._table_rows3d)
        # PyTorch returns logits reshaped to (B*T, C) when targets are given.
        logits2d = logits_pad if (Npad == N and Vp == V) else logits_pad[:N, :V]
        loss = jnp.sum(loss_parts) * (1.0 / N)
        return logits2d, loss

    def _forward_row_gather(self, ids, tgt, B, T):
        # Fallback for vocabularies whose table does not fit VMEM: per-row
        # scalar-prefetch gather (one (1,1,Vp) row DMA per grid step).
        # TODO(synk): batch with manual make_async_copy row DMAs into a
        # double-buffered (2, R, Vp) scratch and/or pipeline_mode=pl.Buffered(3).
        N = B * T
        V, Vp = self.vocab_size, self._vp
        table_rows = self._table_rows3d

        if tgt is None:
            logits3 = pl.pallas_call(
                _bigram_gather_kernel,
                out_shape=jax.ShapeDtypeStruct((N, 1, Vp), jnp.float32),
                grid_spec=pltpu.PrefetchScalarGridSpec(
                    num_scalar_prefetch=1,
                    grid=(N,),
                    in_specs=[
                        pl.BlockSpec((1, 1, Vp),
                                     lambda i, ids_ref: (ids_ref[i], 0, 0)),
                    ],
                    out_specs=pl.BlockSpec((1, 1, Vp),
                                           lambda i, ids_ref: (i, 0, 0)),
                ),
                compiler_params=pltpu.CompilerParams(
                    dimension_semantics=("parallel",)),
            )(ids, table_rows)
            return logits3[:, 0, :V].reshape(B, T, V), None

        logits3, loss_rows = pl.pallas_call(
            _bigram_gather_loss_kernel,
            out_shape=(
                jax.ShapeDtypeStruct((N, 1, Vp), jnp.float32),
                jax.ShapeDtypeStruct((N, 1, 1), jnp.float32),
            ),
            grid_spec=pltpu.PrefetchScalarGridSpec(
                num_scalar_prefetch=2,
                grid=(N,),
                in_specs=[
                    pl.BlockSpec((1, 1, Vp),
                                 lambda i, ids_ref, tgt_ref: (ids_ref[i], 0, 0)),
                ],
                out_specs=(
                    pl.BlockSpec((1, 1, Vp),
                                 lambda i, ids_ref, tgt_ref: (i, 0, 0)),
                    pl.BlockSpec((1, 1, 1),
                                 lambda i, ids_ref, tgt_ref: (i, 0, 0)),
                ),
            ),
            compiler_params=pltpu.CompilerParams(
                dimension_semantics=("parallel",)),
        )(ids, tgt, table_rows)
        logits = logits3[:, 0, :V]
        loss = jnp.sum(loss_rows) * (1.0 / N)
        return logits, loss


if __name__ == "__main__":
    key = jax.random.PRNGKey(0)
    k_tab, k_x, k_y = jax.random.split(key, 3)

    vocab_size = 128
    B, T = 2, 8

    model = BigramModelPallas(vocab_size, k_tab)
    x = jax.random.randint(k_x, (B, T), 0, vocab_size, dtype=jnp.int32)
    targets = jax.random.randint(k_y, (B, T), 0, vocab_size, dtype=jnp.int32)

    # Pure-JAX reference.
    ref_logits = model.token_lookup_table[x.reshape(-1)]
    ref_lse = jax.nn.logsumexp(ref_logits, axis=-1)
    ref_loss = jnp.mean(
        ref_lse - ref_logits[jnp.arange(B * T), targets.reshape(-1)])

    # 1) Fused logits + loss (table-resident-in-VMEM fast path).
    logits, loss = model.forward(x, targets)
    logits, loss = jax.block_until_ready((logits, loss))
    assert logits.shape == (B * T, vocab_size)
    assert jnp.allclose(logits, ref_logits, atol=1e-5)
    assert jnp.allclose(loss, ref_loss, atol=1e-5)

    # 2) Logits-only path (targets=None), PyTorch shape (B, T, C).
    logits_only, none_loss = model.forward(x)
    logits_only = jax.block_until_ready(logits_only)
    assert none_loss is None
    assert logits_only.shape == (B, T, vocab_size)
    assert jnp.allclose(logits_only,
                        ref_logits.reshape(B, T, vocab_size), atol=1e-5)

    # 3) Loss-only training path (skips the logits HBM writeback).
    loss2 = jax.block_until_ready(model.loss_only(x, targets))
    assert jnp.allclose(loss2, ref_loss, atol=1e-5)

    # 4) Large-vocab fallback (per-row scalar-prefetch gather), forced here for
    #    coverage even though vocab_size=128 takes the VMEM-resident fast path.
    model._force_row_gather = True
    logits_g, loss_g = model.forward(x, targets)
    logits_g, loss_g = jax.block_until_ready((logits_g, loss_g))
    model._force_row_gather = False
    assert jnp.allclose(logits_g, ref_logits, atol=1e-5)
    assert jnp.allclose(loss_g, ref_loss, atol=1e-5)

    print("KERNEL_OK")
</pallas_src>

<mosaic_0001>
module attributes {stable_mosaic.version = 11 : i64} {
  func.func @_table_logits_loss_kernel(%arg0: i32, %arg1: memref<16xi32, #tpu.memory_space<smem>>, %arg2: memref<16x1xi32, #tpu.memory_space<vmem>>, %arg3: memref<128x1x128xf32, #tpu.memory_space<vmem>>, %arg4: memref<16x128xf32, #tpu.memory_space<vmem>>, %arg5: memref<1x1x1xf32, #tpu.memory_space<vmem>>) attributes {dimension_semantics = [#tpu.dimension_semantics<parallel>], iteration_bounds = array<i64: 1>, scalar_prefetch = 1 : i64, scratch_operands = 0 : i64, tpu.core_type = #tpu.core_type<tc>, window_params = [{transform_indices = @transform_0, window_bounds = array<i64: 16, 1>}, {pipeline_mode = #tpu.pipeline_mode<synchronous>, transform_indices = @transform_1, window_bounds = array<i64: 128, 1, 128>}, {transform_indices = @transform_2, window_bounds = array<i64: 16, 128>}, {transform_indices = @transform_3, window_bounds = array<i64: 1, 1, 1>}]} {
    %c16_i32 = arith.constant 16 : i32
    %0 = arith.muli %arg0, %c16_i32 : i32
    %c0_i32 = arith.constant 0 : i32
    %1 = arith.addi %0, %c0_i32 : i32
    %2 = arith.index_cast %1 : i32 to index
    %3 = memref.load %arg1[%2] : memref<16xi32, #tpu.memory_space<smem>>
    %4 = arith.index_cast %3 : i32 to index
    %c0 = arith.constant 0 : index
    %c0_0 = arith.constant 0 : index
    %5 = vector.load %arg3[%4, %c0, %c0_0] : memref<128x1x128xf32, #tpu.memory_space<vmem>>, vector<1x1x128xf32>
    %6 = vector.shape_cast %5 : vector<1x1x128xf32> to vector<1x128xf32>
    %c0_1 = arith.constant 0 : index
    %c0_2 = arith.constant 0 : index
    %7 = vector.load %arg4[%c0_1, %c0_2] : memref<16x128xf32, #tpu.memory_space<vmem>>, vector<1x128xf32>
    tpu.vector_store %arg4[%c0_1, %c0_2], %6 {strides = array<i32>} : memref<16x128xf32, #tpu.memory_space<vmem>>, vector<1x128xf32>,
    %c1_i32 = arith.constant 1 : i32
    %8 = arith.addi %0, %c1_i32 : i32
    %9 = arith.index_cast %8 : i32 to index
    %10 = memref.load %arg1[%9] : memref<16xi32, #tpu.memory_space<smem>>
    %11 = arith.index_cast %10 : i32 to index
    %c0_3 = arith.constant 0 : index
    %c0_4 = arith.constant 0 : index
    %12 = vector.load %arg3[%11, %c0_3, %c0_4] : memref<128x1x128xf32, #tpu.memory_space<vmem>>, vector<1x1x128xf32>
    %13 = vector.shape_cast %12 : vector<1x1x128xf32> to vector<1x128xf32>
    %c1 = arith.constant 1 : index
    %c0_5 = arith.constant 0 : index
    %14 = vector.load %arg4[%c1, %c0_5] : memref<16x128xf32, #tpu.memory_space<vmem>>, vector<1x128xf32>
    tpu.vector_store %arg4[%c1, %c0_5], %13 {strides = array<i32>} : memref<16x128xf32, #tpu.memory_space<vmem>>, vector<1x128xf32>,
    %c2_i32 = arith.constant 2 : i32
    %15 = arith.addi %0, %c2_i32 : i32
    %16 = arith.index_cast %15 : i32 to index
    %17 = memref.load %arg1[%16] : memref<16xi32, #tpu.memory_space<smem>>
    %18 = arith.index_cast %17 : i32 to index
    %c0_6 = arith.constant 0 : index
    %c0_7 = arith.constant 0 : index
    %19 = vector.load %arg3[%18, %c0_6, %c0_7] : memref<128x1x128xf32, #tpu.memory_space<vmem>>, vector<1x1x128xf32>
    %20 = vector.shape_cast %19 : vector<1x1x128xf32> to vector<1x128xf32>
    %c2 = arith.constant 2 : index
    %c0_8 = arith.constant 0 : index
    %21 = vector.load %arg4[%c2, %c0_8] : memref<16x128xf32, #tpu.memory_space<vmem>>, vector<1x128xf32>
    tpu.vector_store %arg4[%c2, %c0_8], %20 {strides = array<i32>} : memref<16x128xf32, #tpu.memory_space<vmem>>, vector<1x128xf32>,
    %c3_i32 = arith.constant 3 : i32
    %22 = arith.addi %0, %c3_i32 : i32
    %23 = arith.index_cast %22 : i32 to index
    %24 = memref.load %arg1[%23] : memref<16xi32, #tpu.memory_space<smem>>
    %25 = arith.index_cast %24 : i32 to index
    %c0_9 = arith.constant 0 : index
    %c0_10 = arith.constant 0 : index
    %26 = vector.load %arg3[%25, %c0_9, %c0_10] : memref<128x1x128xf32, #tpu.memory_space<vmem>>, vector<1x1x128xf32>
    %27 = vector.shape_cast %26 : vector<1x1x128xf32> to vector<1x128xf32>
    %c3 = arith.constant 3 : index
    %c0_11 = arith.constant 0 : index
    %28 = vector.load %arg4[%c3, %c0_11] : memref<16x128xf32, #tpu.memory_space<vmem>>, vector<1x128xf32>
    tpu.vector_store %arg4[%c3, %c0_11], %27 {strides = array<i32>} : memref<16x128xf32, #tpu.memory_space<vmem>>, vector<1x128xf32>,
    %c4_i32 = arith.constant 4 : i32
    %29 = arith.addi %0, %c4_i32 : i32
    %30 = arith.index_cast %29 : i32 to index
    %31 = memref.load %arg1[%30] : memref<16xi32, #tpu.memory_space<smem>>
    %32 = arith.index_cast %31 : i32 to index
    %c0_12 = arith.constant 0 : index
    %c0_13 = arith.constant 0 : index
    %33 = vector.load %arg3[%32, %c0_12, %c0_13] : memref<128x1x128xf32, #tpu.memory_space<vmem>>, vector<1x1x128xf32>
    %34 = vector.shape_cast %33 : vector<1x1x128xf32> to vector<1x128xf32>
    %c4 = arith.constant 4 : index
    %c0_14 = arith.constant 0 : index
    %35 = vector.load %arg4[%c4, %c0_14] : memref<16x128xf32, #tpu.memory_space<vmem>>, vector<1x128xf32>
    tpu.vector_store %arg4[%c4, %c0_14], %34 {strides = array<i32>} : memref<16x128xf32, #tpu.memory_space<vmem>>, vector<1x128xf32>,
    %c5_i32 = arith.constant 5 : i32
    %36 = arith.addi %0, %c5_i32 : i32
    %37 = arith.index_cast %36 : i32 to index
    %38 = memref.load %arg1[%37] : memref<16xi32, #tpu.memory_space<smem>>
    %39 = arith.index_cast %38 : i32 to index
    %c0_15 = arith.constant 0 : index
    %c0_16 = arith.constant 0 : index
    %40 = vector.load %arg3[%39, %c0_15, %c0_16] : memref<128x1x128xf32, #tpu.memory_space<vmem>>, vector<1x1x128xf32>
    %41 = vector.shape_cast %40 : vector<1x1x128xf32> to vector<1x128xf32>
    %c5 = arith.constant 5 : index
    %c0_17 = arith.constant 0 : index
    %42 = vector.load %arg4[%c5, %c0_17] : memref<16x128xf32, #tpu.memory_space<vmem>>, vector<1x128xf32>
    tpu.vector_store %arg4[%c5, %c0_17], %41 {strides = array<i32>} : memref<16x128xf32, #tpu.memory_space<vmem>>, vector<1x128xf32>,
    %c6_i32 = arith.constant 6 : i32
    %43 = arith.addi %0, %c6_i32 : i32
    %44 = arith.index_cast %43 : i32 to index
    %45 = memref.load %arg1[%44] : memref<16xi32, #tpu.memory_space<smem>>
    %46 = arith.index_cast %45 : i32 to index
    %c0_18 = arith.constant 0 : index
    %c0_19 = arith.constant 0 : index
    %47 = vector.load %arg3[%46, %c0_18, %c0_19] : memref<128x1x128xf32, #tpu.memory_space<vmem>>, vector<1x1x128xf32>
    %48 = vector.shape_cast %47 : vector<1x1x128xf32> to vector<1x128xf32>
    %c6 = arith.constant 6 : index
    %c0_20 = arith.constant 0 : index
    %49 = vector.load %arg4[%c6, %c0_20] : memref<16x128xf32, #tpu.memory_space<vmem>>, vector<1x128xf32>
    tpu.vector_store %arg4[%c6, %c0_20], %48 {strides = array<i32>} : memref<16x128xf32, #tpu.memory_space<vmem>>, vector<1x128xf32>,
    %c7_i32 = arith.constant 7 : i32
    %50 = arith.addi %0, %c7_i32 : i32
    %51 = arith.index_cast %50 : i32 to index
    %52 = memref.load %arg1[%51] : memref<16xi32, #tpu.memory_space<smem>>
    %53 = arith.index_cast %52 : i32 to index
    %c0_21 = arith.constant 0 : index
    %c0_22 = arith.constant 0 : index
    %54 = vector.load %arg3[%53, %c0_21, %c0_22] : memref<128x1x128xf32, #tpu.memory_space<vmem>>, vector<1x1x128xf32>
    %55 = vector.shape_cast %54 : vector<1x1x128xf32> to vector<1x128xf32>
    %c7 = arith.constant 7 : index
    %c0_23 = arith.constant 0 : index
    %56 = vector.load %arg4[%c7, %c0_23] : memref<16x128xf32, #tpu.memory_space<vmem>>, vector<1x128xf32>
    tpu.vector_store %arg4[%c7, %c0_23], %55 {strides = array<i32>} : memref<16x128xf32, #tpu.memory_space<vmem>>, vector<1x128xf32>,
    %c8_i32 = arith.constant 8 : i32
    %57 = arith.addi %0, %c8_i32 : i32
    %58 = arith.index_cast %57 : i32 to index
    %59 = memref.load %arg1[%58] : memref<16xi32, #tpu.memory_space<smem>>
    %60 = arith.index_cast %59 : i32 to index
    %c0_24 = arith.constant 0 : index
    %c0_25 = arith.constant 0 : index
    %61 = vector.load %arg3[%60, %c0_24, %c0_25] : memref<128x1x128xf32, #tpu.memory_space<vmem>>, vector<1x1x128xf32>
    %62 = vector.shape_cast %61 : vector<1x1x128xf32> to vector<1x128xf32>
    %c8 = arith.constant 8 : index
    %c0_26 = arith.constant 0 : index
    %63 = vector.load %arg4[%c8, %c0_26] : memref<16x128xf32, #tpu.memory_space<vmem>>, vector<1x128xf32>
    tpu.vector_store %arg4[%c8, %c0_26], %62 {strides = array<i32>} : memref<16x128xf32, #tpu.memory_space<vmem>>, vector<1x128xf32>,
    %c9_i32 = arith.constant 9 : i32
    %64 = arith.addi %0, %c9_i32 : i32
    %65 = arith.index_cast %64 : i32 to index
    %66 = memref.load %arg1[%65] : memref<16xi32, #tpu.memory_space<smem>>
    %67 = arith.index_cast %66 : i32 to index
    %c0_27 = arith.constant 0 : index
    %c0_28 = arith.constant 0 : index
    %68 = vector.load %arg3[%67, %c0_27, %c0_28] : memref<128x1x128xf32, #tpu.memory_space<vmem>>, vector<1x1x128xf32>
    %69 = vector.shape_cast %68 : vector<1x1x128xf32> to vector<1x128xf32>
    %c9 = arith.constant 9 : index
    %c0_29 = arith.constant 0 : index
    %70 = vector.load %arg4[%c9, %c0_29] : memref<16x128xf32, #tpu.memory_space<vmem>>, vector<1x128xf32>
    tpu.vector_store %arg4[%c9, %c0_29], %69 {strides = array<i32>} : memref<16x128xf32, #tpu.memory_space<vmem>>, vector<1x128xf32>,
    %c10_i32 = arith.constant 10 : i32
    %71 = arith.addi %0, %c10_i32 : i32
    %72 = arith.index_cast %71 : i32 to index
    %73 = memref.load %arg1[%72] : memref<16xi32, #tpu.memory_space<smem>>
    %74 = arith.index_cast %73 : i32 to index
    %c0_30 = arith.constant 0 : index
    %c0_31 = arith.constant 0 : index
    %75 = vector.load %arg3[%74, %c0_30, %c0_31] : memref<128x1x128xf32, #tpu.memory_space<vmem>>, vector<1x1x128xf32>
    %76 = vector.shape_cast %75 : vector<1x1x128xf32> to vector<1x128xf32>
    %c10 = arith.constant 10 : index
    %c0_32 = arith.constant 0 : index
    %77 = vector.load %arg4[%c10, %c0_32] : memref<16x128xf32, #tpu.memory_space<vmem>>, vector<1x128xf32>
    tpu.vector_store %arg4[%c10, %c0_32], %76 {strides = array<i32>} : memref<16x128xf32, #tpu.memory_space<vmem>>, vector<1x128xf32>,
    %c11_i32 = arith.constant 11 : i32
    %78 = arith.addi %0, %c11_i32 : i32
    %79 = arith.index_cast %78 : i32 to index
    %80 = memref.load %arg1[%79] : memref<16xi32, #tpu.memory_space<smem>>
    %81 = arith.index_cast %80 : i32 to index
    %c0_33 = arith.constant 0 : index
    %c0_34 = arith.constant 0 : index
    %82 = vector.load %arg3[%81, %c0_33, %c0_34] : memref<128x1x128xf32, #tpu.memory_space<vmem>>, vector<1x1x128xf32>
    %83 = vector.shape_cast %82 : vector<1x1x128xf32> to vector<1x128xf32>
    %c11 = arith.constant 11 : index
    %c0_35 = arith.constant 0 : index
    %84 = vector.load %arg4[%c11, %c0_35] : memref<16x128xf32, #tpu.memory_space<vmem>>, vector<1x128xf32>
    tpu.vector_store %arg4[%c11, %c0_35], %83 {strides = array<i32>} : memref<16x128xf32, #tpu.memory_space<vmem>>, vector<1x128xf32>,
    %c12_i32 = arith.constant 12 : i32
    %85 = arith.addi %0, %c12_i32 : i32
    %86 = arith.index_cast %85 : i32 to index
    %87 = memref.load %arg1[%86] : memref<16xi32, #tpu.memory_space<smem>>
    %88 = arith.index_cast %87 : i32 to index
    %c0_36 = arith.constant 0 : index
    %c0_37 = arith.constant 0 : index
    %89 = vector.load %arg3[%88, %c0_36, %c0_37] : memref<128x1x128xf32, #tpu.memory_space<vmem>>, vector<1x1x128xf32>
    %90 = vector.shape_cast %89 : vector<1x1x128xf32> to vector<1x128xf32>
    %c12 = arith.constant 12 : index
    %c0_38 = arith.constant 0 : index
    %91 = vector.load %arg4[%c12, %c0_38] : memref<16x128xf32, #tpu.memory_space<vmem>>, vector<1x128xf32>
    tpu.vector_store %arg4[%c12, %c0_38], %90 {strides = array<i32>} : memref<16x128xf32, #tpu.memory_space<vmem>>, vector<1x128xf32>,
    %c13_i32 = arith.constant 13 : i32
    %92 = arith.addi %0, %c13_i32 : i32
    %93 = arith.index_cast %92 : i32 to index
    %94 = memref.load %arg1[%93] : memref<16xi32, #tpu.memory_space<smem>>
    %95 = arith.index_cast %94 : i32 to index
    %c0_39 = arith.constant 0 : index
    %c0_40 = arith.constant 0 : index
    %96 = vector.load %arg3[%95, %c0_39, %c0_40] : memref<128x1x128xf32, #tpu.memory_space<vmem>>, vector<1x1x128xf32>
    %97 = vector.shape_cast %96 : vector<1x1x128xf32> to vector<1x128xf32>
    %c13 = arith.constant 13 : index
    %c0_41 = arith.constant 0 : index
    %98 = vector.load %arg4[%c13, %c0_41] : memref<16x128xf32, #tpu.memory_space<vmem>>, vector<1x128xf32>
    tpu.vector_store %arg4[%c13, %c0_41], %97 {strides = array<i32>} : memref<16x128xf32, #tpu.memory_space<vmem>>, vector<1x128xf32>,
    %c14_i32 = arith.constant 14 : i32
    %99 = arith.addi %0, %c14_i32 : i32
    %100 = arith.index_cast %99 : i32 to index
    %101 = memref.load %arg1[%100] : memref<16xi32, #tpu.memory_space<smem>>
    %102 = arith.index_cast %101 : i32 to index
    %c0_42 = arith.constant 0 : index
    %c0_43 = arith.constant 0 : index
    %103 = vector.load %arg3[%102, %c0_42, %c0_43] : memref<128x1x128xf32, #tpu.memory_space<vmem>>, vector<1x1x128xf32>
    %104 = vector.shape_cast %103 : vector<1x1x128xf32> to vector<1x128xf32>
    %c14 = arith.constant 14 : index
    %c0_44 = arith.constant 0 : index
    %105 = vector.load %arg4[%c14, %c0_44] : memref<16x128xf32, #tpu.memory_space<vmem>>, vector<1x128xf32>
    tpu.vector_store %arg4[%c14, %c0_44], %104 {strides = array<i32>} : memref<16x128xf32, #tpu.memory_space<vmem>>, vector<1x128xf32>,
    %c15_i32 = arith.constant 15 : i32
    %106 = arith.addi %0, %c15_i32 : i32
    %107 = arith.index_cast %106 : i32 to index
    %108 = memref.load %arg1[%107] : memref<16xi32, #tpu.memory_space<smem>>
    %109 = arith.index_cast %108 : i32 to index
    %c0_45 = arith.constant 0 : index
    %c0_46 = arith.constant 0 : index
    %110 = vector.load %arg3[%109, %c0_45, %c0_46] : memref<128x1x128xf32, #tpu.memory_space<vmem>>, vector<1x1x128xf32>
    %111 = vector.shape_cast %110 : vector<1x1x128xf32> to vector<1x128xf32>
    %c15 = arith.constant 15 : index
    %c0_47 = arith.constant 0 : index
    %112 = vector.load %arg4[%c15, %c0_47] : memref<16x128xf32, #tpu.memory_space<vmem>>, vector<1x128xf32>
    tpu.vector_store %arg4[%c15, %c0_47], %111 {strides = array<i32>} : memref<16x128xf32, #tpu.memory_space<vmem>>, vector<1x128xf32>,
    %c0_48 = arith.constant 0 : index
    %c0_49 = arith.constant 0 : index
    %113 = vector.load %arg4[%c0_48, %c0_49] : memref<16x128xf32, #tpu.memory_space<vmem>>, vector<16x128xf32>
    %c0_50 = arith.constant 0 : index
    %c0_51 = arith.constant 0 : index
    %114 = vector.load %arg2[%c0_50, %c0_51] : memref<16x1xi32, #tpu.memory_space<vmem>>, vector<16x1xi32>
    %cst = arith.constant dense<0xFF800000> : vector<16xf32>
    %115 = vector.multi_reduction <maximumf>, %113, %cst [1] : vector<16x128xf32> to vector<16xf32>
    %116 = vector.shape_cast %115 : vector<16xf32> to vector<16x1xf32>
    %117 = vector.broadcast %116 : vector<16x1xf32> to vector<16x128xf32>
    %118 = arith.subf %113, %117 : vector<16x128xf32>
    %119 = math.exp %118 : vector<16x128xf32>
    %cst_52 = arith.constant dense<0.000000e+00> : vector<16xf32>
    %120 = vector.multi_reduction <add>, %119, %cst_52 [1] : vector<16x128xf32> to vector<16xf32>
    %121 = vector.shape_cast %120 : vector<16xf32> to vector<16x1xf32>
    %122 = math.log %121 : vector<16x1xf32>
    %123 = arith.addf %122, %116 : vector<16x1xf32>
    %124 = tpu.iota {dimensions = array<i32: 1>} : vector<16x128xi32>
    %125 = vector.broadcast %114 : vector<16x1xi32> to vector<16x128xi32>
    %126 = arith.cmpi eq, %124, %125 : vector<16x128xi32>
    %cst_53 = arith.constant 0.000000e+00 : f32
    %127 = vector.broadcast %cst_53 : f32 to vector<16x128xf32>
    %128 = arith.select %126, %113, %127 : vector<16x128xi1>, vector<16x128xf32>
    %cst_54 = arith.constant dense<0.000000e+00> : vector<16xf32>
    %129 = vector.multi_reduction <add>, %128, %cst_54 [1] : vector<16x128xf32> to vector<16xf32>
    %130 = vector.shape_cast %129 : vector<16xf32> to vector<16x1xf32>
    %131 = arith.subf %123, %130 : vector<16x1xf32>
    %c16_i32_55 = arith.constant 16 : i32
    %132 = arith.muli %arg0, %c16_i32_55 : i32
    %133 = tpu.iota {dimensions = array<i32: 0>} : vector<16x1xi32>
    %134 = vector.broadcast %132 : i32 to vector<16x1xi32>
    %135 = arith.addi %134, %133 : vector<16x1xi32>
    %c16_i32_56 = arith.constant 16 : i32
    %136 = vector.broadcast %c16_i32_56 : i32 to vector<16x1xi32>
    %137 = arith.cmpi slt, %135, %136 : vector<16x1xi32>
    %cst_57 = arith.constant 0.000000e+00 : f32
    %138 = vector.broadcast %cst_57 : f32 to vector<16x1xf32>
    %139 = arith.select %137, %131, %138 : vector<16x1xi1>, vector<16x1xf32>
    %140 = vector.shape_cast %139 : vector<16x1xf32> to vector<1x16x1xf32>
    %cst_58 = arith.constant dense<0.000000e+00> : vector<1xf32>
    %141 = vector.multi_reduction <add>, %140, %cst_58 [1, 2] : vector<1x16x1xf32> to vector<1xf32>
    %142 = vector.shape_cast %141 : vector<1xf32> to vector<1x1x1xf32>
    %143 = vector.extract %142[0, 0, 0] : f32 from vector<1x1x1xf32>
    %144 = vector.broadcast %143 : f32 to vector<1x1x1xf32>
    %c0_59 = arith.constant 0 : index
    %c0_60 = arith.constant 0 : index
    %c0_61 = arith.constant 0 : index
    %145 = vector.load %arg5[%c0_59, %c0_60, %c0_61] : memref<1x1x1xf32, #tpu.memory_space<vmem>>, vector<1x1x1xf32>
    tpu.vector_store %arg5[%c0_59, %c0_60, %c0_61], %144 {strides = array<i32>} : memref<1x1x1xf32, #tpu.memory_space<vmem>>, vector<1x1x1xf32>,
    return
  }
  func.func @transform_0(%arg0: i32, %arg1: memref<16xi32, #tpu.memory_space<smem>>) -> (i32, i32) {
    %c0_i32 = arith.constant 0 : i32
    %c0_i32_0 = arith.constant 0 : i32
    return %arg0, %c0_i32 : i32, i32
  }
  func.func @transform_1(%arg0: i32, %arg1: memref<16xi32, #tpu.memory_space<smem>>) -> (i32, i32, i32) {
    %c0_i32 = arith.constant 0 : i32
    %c0_i32_0 = arith.constant 0 : i32
    %c0_i32_1 = arith.constant 0 : i32
    %c0_i32_2 = arith.constant 0 : i32
    return %c0_i32, %c0_i32_0, %c0_i32_1 : i32, i32, i32
  }
  func.func @transform_2(%arg0: i32, %arg1: memref<16xi32, #tpu.memory_space<smem>>) -> (i32, i32) {
    %c0_i32 = arith.constant 0 : i32
    %c0_i32_0 = arith.constant 0 : i32
    return %arg0, %c0_i32 : i32, i32
  }
  func.func @transform_3(%arg0: i32, %arg1: memref<16xi32, #tpu.memory_space<smem>>) -> (i32, i32, i32) {
    %c0_i32 = arith.constant 0 : i32
    %c0_i32_0 = arith.constant 0 : i32
    %c0_i32_1 = arith.constant 0 : i32
    return %arg0, %c0_i32, %c0_i32_0 : i32, i32, i32
  }
}

</mosaic_0001>

<llo_original>
// kernel: tpu_custom_call.1
$region0: #{tpu_custom_call.1}
  #allocation0 [shape = 'u32[]', space=smem, size = 0x4, offset = 0x4, fixed_abs, tag = 'smem constant byte address 0x4 - core index']
  #allocation1 [shape = 'u32[144,128]{1,0:T(1,128)}', space=vmem, size = 0x12000, scoped, tag = 'internal scratch']
  #allocation2 [shape = 's32[1]{0}', space=sflag, size = 0x4, scoped, tag = 'scoped memory for tpu_custom_call.1']
  #allocation3 [shape = 'u8[512]{0}', space=smem, size = 0x200, scoped, tag = 'prefetched SMEM operand 0']
  %s0 = inlined_call_operand.vmem [shape: s32[16], index: 0, kind: input, shape index: {}]
  %s1 = inlined_call_operand.vmem [shape: s32[16,1], index: 1, kind: input, shape index: {}]
  %s2 = inlined_call_operand.hbm [shape: f32[128,1,128], index: 2, kind: input, shape index: {}]
  %s3 = inlined_call_operand.hbm [shape: f32[16,128], index: 3, kind: output, shape index: {0}]
  %s4 = inlined_call_operand.hbm [shape: f32[1,1,1], index: 4, kind: output, shape index: {1}]
  %5 = xla_tuple %s3, %s4
  %s6 = sld [smem:[#allocation0]]
  $region30: #{tpu_custom_call.1} parent=0
    _
  %s8 = ssub.s32 1, %s6
  %s9 = scalar_select 0, %s8, %s6
  %s10 = sshll.u32 %s0, 4
  %s11 = int_to_ptr.vmem [resolvable:$true] %s10
  %13 = dma.vmem_to_smem %s11, 16, [#allocation3], [#allocation2]
  %14 = dma.done [#allocation2], 16
  %15 = sfence
  $region1: #{tpu_custom_call.1} parent=0
    #allocation4 [shape = 'u8[65536]{0}', space=vmem, size = 0x10000, scoped, tag = 'input window, operand 2, single buffered']
    #allocation5 [shape = 's32[1]{0}', space=sflag, size = 0x4, scoped, tag = 'scoped memory for tpu_custom_call.1']
    #allocation6 [shape = 's32[1]{0}', space=sflag, size = 0x4, scoped, tag = 'scoped memory for tpu_custom_call.1']
    #allocation7 [shape = 'u8[8192]{0}', space=vmem, size = 0x2000, scoped, tag = 'output window, operand 0, single buffered']
    #allocation8 [shape = 'u8[512]{0}', space=vmem, size = 0x400, scoped, tag = 'output window, operand 1, single buffered']
    #allocation9 [shape = 's32[1]{0}', space=sflag, size = 0x4, scoped, tag = 'scoped memory for tpu_custom_call.1']
    %16 = vsyncpa [#allocation5], 0
    %17 = vsyncpa [#allocation6], 0
    %18 = vsyncpa [#allocation9], 0
    // Predicated region
    $region2: #{tpu_custom_call.1} parent=1 // pred_check
      _
    $region3: #{tpu_custom_call.1} parent=1 // pred_check_branch
      %20 = sbr.rel (0) target = $region5
    $region4: #{tpu_custom_call.1} parent=1 // pred_region
      _
    $region5: #{tpu_custom_call.1} parent=1 // pred_fallthru
      _
    // Predicated region
    $region6: #{tpu_custom_call.1} parent=1 // pred_check
      _
    $region7: #{tpu_custom_call.1} parent=1 // pred_check_branch
      %22 = sbr.rel (0) target = $region9
    $region8: #{tpu_custom_call.1} parent=1 // pred_region
      %s24 = ssub.s32 2048, 2048
      %25 = vsyncadd [#allocation5], %s24
      %s26 = sshll.u32 [#allocation4], 4
      %s27 = int_to_ptr.vmem [resolvable:$true] %s26
      %32 = dma.hbm_to_vmem [thread:$0]  %s2, 2048, %s27, [#allocation5], 16, 16, 1
    $region9: #{tpu_custom_call.1} parent=1 // pred_fallthru
      _
    // Predicated region
    $region10: #{tpu_custom_call.1} parent=1 // pred_check
      _
    $region11: #{tpu_custom_call.1} parent=1 // pred_check_branch
      %34 = sbr.rel (0) target = $region13
    $region12: #{tpu_custom_call.1} parent=1 // pred_region
      %35 = dma.done [#allocation5], 2048
    $region13: #{tpu_custom_call.1} parent=1 // pred_fallthru
      _
    %s36 = smul.u32 0, 16
    %s37 = sld [smem:[#allocation3 + %s36]]
    %s38 = scalar_lea.vmem [#allocation4], %s37
    %v39 = vld [vmem:[%s38] sm:$0x1]
    %40 = vst [vmem:[#allocation7] sm:$0x1] %v39
    %s41 = sadd.s32 %s36, 1
    %s42 = sld [smem:[#allocation3 + %s41]]
    %s43 = scalar_lea.vmem [#allocation4], %s42
    %v44 = vld [vmem:[%s43] sm:$0x1]
    %45 = vst [vmem:[#allocation7 + $0x1] sm:$0x1] %v44
    %s46 = sadd.s32 %s36, 2
    %s47 = sld [smem:[#allocation3 + %s46]]
    %s48 = scalar_lea.vmem [#allocation4], %s47
    %v49 = vld [vmem:[%s48] sm:$0x1]
    %50 = vst [vmem:[#allocation7 + $0x2] sm:$0x1] %v49
    %s51 = sadd.s32 %s36, 3
    %s52 = sld [smem:[#allocation3 + %s51]]
    %s53 = scalar_lea.vmem [#allocation4], %s52
    %v54 = vld [vmem:[%s53] sm:$0x1]
    %55 = vst [vmem:[#allocation7 + $0x3] sm:$0x1] %v54
    %s56 = sadd.s32 %s36, 4
    %s57 = sld [smem:[#allocation3 + %s56]]
    %s58 = scalar_lea.vmem [#allocation4], %s57
    %v59 = vld [vmem:[%s58] sm:$0x1]
    %60 = vst [vmem:[#allocation7 + $0x4] sm:$0x1] %v59
    %s61 = sadd.s32 %s36, 5
    %s62 = sld [smem:[#allocation3 + %s61]]
    %s63 = scalar_lea.vmem [#allocation4], %s62
    %v64 = vld [vmem:[%s63] sm:$0x1]
    %65 = vst [vmem:[#allocation7 + $0x5] sm:$0x1] %v64
    %s66 = sadd.s32 %s36, 6
    %s67 = sld [smem:[#allocation3 + %s66]]
    %s68 = scalar_lea.vmem [#allocation4], %s67
    %v69 = vld [vmem:[%s68] sm:$0x1]
    %70 = vst [vmem:[#allocation7 + $0x6] sm:$0x1] %v69
    %s71 = sadd.s32 %s36, 7
    %s72 = sld [smem:[#allocation3 + %s71]]
    %s73 = scalar_lea.vmem [#allocation4], %s72
    %v74 = vld [vmem:[%s73] sm:$0x1]
    %75 = vst [vmem:[#allocation7 + $0x7] sm:$0x1] %v74
    %s76 = sadd.s32 %s36, 8
    %s77 = sld [smem:[#allocation3 + %s76]]
    %s78 = scalar_lea.vmem [#allocation4], %s77
    %v79 = vld [vmem:[%s78] sm:$0x1]
    %80 = vst [vmem:[#allocation7 + $0x8] sm:$0x1] %v79
    %s81 = sadd.s32 %s36, 9
    %s82 = sld [smem:[#allocation3 + %s81]]
    %s83 = scalar_lea.vmem [#allocation4], %s82
    %v84 = vld [vmem:[%s83] sm:$0x1]
    %85 = vst [vmem:[#allocation7 + $0x9] sm:$0x1] %v84
    %s86 = sadd.s32 %s36, 10
    %s87 = sld [smem:[#allocation3 + %s86]]
    %s88 = scalar_lea.vmem [#allocation4], %s87
    %v89 = vld [vmem:[%s88] sm:$0x1]
    %90 = vst [vmem:[#allocation7 + $0xa] sm:$0x1] %v89
    %s91 = sadd.s32 %s36, 11
    %s92 = sld [smem:[#allocation3 + %s91]]
    %s93 = scalar_lea.vmem [#allocation4], %s92
    %v94 = vld [vmem:[%s93] sm:$0x1]
    %95 = vst [vmem:[#allocation7 + $0xb] sm:$0x1] %v94
    %s96 = sadd.s32 %s36, 12
    %s97 = sld [smem:[#allocation3 + %s96]]
    %s98 = scalar_lea.vmem [#allocation4], %s97
    %v99 = vld [vmem:[%s98] sm:$0x1]
    %100 = vst [vmem:[#allocation7 + $0xc] sm:$0x1] %v99
    %s101 = sadd.s32 %s36, 13
    %s102 = sld [smem:[#allocation3 + %s101]]
    %s103 = scalar_lea.vmem [#allocation4], %s102
    %v104 = vld [vmem:[%s103] sm:$0x1]
    %105 = vst [vmem:[#allocation7 + $0xd] sm:$0x1] %v104
    %s106 = sadd.s32 %s36, 14
    %s107 = sld [smem:[#allocation3 + %s106]]
    %s108 = scalar_lea.vmem [#allocation4], %s107
    %v109 = vld [vmem:[%s108] sm:$0x1]
    %110 = vst [vmem:[#allocation7 + $0xe] sm:$0x1] %v109
    %s111 = sadd.s32 %s36, 15
    %s112 = sld [smem:[#allocation3 + %s111]]
    %s113 = scalar_lea.vmem [#allocation4], %s112
    %v114 = vld [vmem:[%s113] sm:$0x1]
    %115 = vst [vmem:[#allocation7 + $0xf] sm:$0x1] %v114
    %v116 = vld [vmem:[#allocation7] sm:$0xff]
    %v117 = vld [vmem:[#allocation7 + $0x8] sm:$0xff]
    %v118 = vld [vmem:[%s1] sm:$0xff]
    %v119 = vld [vmem:[%s1 + $0x8] sm:$0xff]
    %120 = vmax.xlane.f32.xlu0 %v116
    %v121 = vpop.xlane.xlu0 %120
    %122 = vmax.xlane.f32.xlu0 %v117
    %v123 = vpop.xlane.xlu0 %122
    %v124 = vsub.f32 %v116, %v121
    %v125 = vsub.f32 %v117, %v123
    %v126 = vmul.f32 %v124, 1.442695
    %v127 = vpow.pop %v126
    %v128 = vmul.f32 %v125, 1.442695
    %v129 = vpow.pop %v128
    %130 = vadd.xlane.f32.xlu0 %v127
    %v131 = vpop.xlane.xlu0 %130
    %132 = vadd.xlane.f32.xlu0 %v129
    %v133 = vpop.xlane.xlu0 %132
    %v134 = vlog2.pop %v131
    %v135 = vmul.f32 %v134, 0.6931472
    %v136 = vlog2.pop %v133
    %v137 = vmul.f32 %v136, 0.6931472
    %v138 = vadd.f32 %v135, %v121
    %v139 = vadd.f32 %v137, %v123
    %v140 = vlaneseq
    %v141 = vand.u32 %v140, 127
    %142 = vset.pattern.permute.xlu0 0
    %143 = vperm.xlu0 %142, %v118
    %v144 = vpop.permute.xlu0 %143
    %145 = vset.pattern.permute.xlu0 0
    %146 = vperm.xlu0 %145, %v119
    %v147 = vpop.permute.xlu0 %146
    %vm148 = vcmp.eq.s32.totalorder %v141, %v144
    %vm149 = vcmp.eq.s32.totalorder %v141, %v147
    %v150 = vsel %vm148, %v116, 0.0
    %v151 = vsel %vm149, %v117, 0.0
    %152 = vadd.xlane.f32.xlu0 %v150
    %v153 = vpop.xlane.xlu0 %152
    %154 = vadd.xlane.f32.xlu0 %v151
    %v155 = vpop.xlane.xlu0 %154
    %v156 = vsub.f32 %v138, %v153
    %v157 = vsub.f32 %v139, %v155
    %v158 = vlaneseq
    %v159 = vshrl.u32 %v158, 7
    %v160 = vadd.s32 %v159, 8
    %v161 = vstv %s36
    %v162 = vadd.s32 %v161, %v159
    %v163 = vadd.s32 %v161, %v160
    %vm164 = vcmp.lt.s32.totalorder %v162, 16
    %vm165 = vcmp.lt.s32.totalorder %v163, 16
    %v166 = vsel %vm164, %v156, 0.0
    %v167 = vsel %vm165, %v157, 0.0
    %vm168 = vcmask 7168
    %v169 = vsel %vm168, %v166, 0.0
    %v170 = vsel %vm168, %v167, 0.0
    %v171 = vadd.f32 %v169, %v170
    %172 = vadd.xlane.f32.xlu0 %v171
    %v173 = vpop.xlane.xlu0 %172
    %v174 = vrot.slane %v173, 4
    %v175 = vadd.f32 %v173, %v174
    %v176 = vrot.slane %v175, 2
    %v177 = vadd.f32 %v175, %v176
    %v178 = vrot.slane %v177, 1
    %v179 = vadd.f32 %v177, %v178
    %s180 = vtos %v179
    %v181 = vstv %s180
    %vm182 = vcmask 0
    %183 = vst.msk [vmem:[#allocation8] sm:$0x1] %vm182, %v181
    // Predicated region
    $region14: #{tpu_custom_call.1} parent=1 // pred_check
      _
    $region15: #{tpu_custom_call.1} parent=1 // pred_check_branch
      %185 = sbr.rel (0) target = $region17
    $region16: #{tpu_custom_call.1} parent=1 // pred_region
      %s187 = ssub.s32 256, 256
      %188 = vsyncadd [#allocation6], %s187
      %s189 = sshll.u32 [#allocation7], 4
      %s190 = int_to_ptr.vmem [resolvable:$true] %s189
      %195 = dma.vmem_to_hbm [thread:$0]  %s190, 256, %s3, [#allocation6], 128, 128, 8
    $region17: #{tpu_custom_call.1} parent=1 // pred_fallthru
      _
    // Predicated region
    $region18: #{tpu_custom_call.1} parent=1 // pred_check
      _
    $region19: #{tpu_custom_call.1} parent=1 // pred_check_branch
      %197 = sbr.rel (0) target = $region21
    $region20: #{tpu_custom_call.1} parent=1 // pred_region
      %s199 = ssub.s32 16, 16
      %200 = vsyncadd [#allocation9], %s199
      %s202 = sshll.u32 [#allocation8], 4
      %s203 = int_to_ptr.vmem [resolvable:$true] %s202
      %205 = dma.vmem_to_hbm [thread:$0]  %s203, 16, %s4, [#allocation9]
    $region21: #{tpu_custom_call.1} parent=1 // pred_fallthru
      _
    // Predicated region
    $region22: #{tpu_custom_call.1} parent=1 // pred_check
      _
    $region23: #{tpu_custom_call.1} parent=1 // pred_check_branch
      %207 = sbr.rel (0) target = $region25
    $region24: #{tpu_custom_call.1} parent=1 // pred_region
      %208 = dma.done [#allocation6], 256
    $region25: #{tpu_custom_call.1} parent=1 // pred_fallthru
      _
    // Predicated region
    $region26: #{tpu_custom_call.1} parent=1 // pred_check
      _
    $region27: #{tpu_custom_call.1} parent=1 // pred_check_branch
      %210 = sbr.rel (0) target = $region29
    $region28: #{tpu_custom_call.1} parent=1 // pred_region
      %211 = dma.done [#allocation9], 16
    $region29: #{tpu_custom_call.1} parent=1 // pred_fallthru
      _
    %212 = vsyncpa [#allocation5], 1
    %213 = vsyncpa [#allocation6], 1
    %214 = vsyncpa [#allocation9], 1

</llo_original>
